<compile_context>
chip_gen: v6e
topology: v6e:2x2x1
jax: 0.10.0
libtpu: 0.0.40
codegen_flags: <defaults>
</compile_context>

<pallas_src>
import functools

import jax
import jax.numpy as jnp
from jax.experimental import pallas as pl
from jax.experimental.pallas import tpu as pltpu


def _uniform_kernel(x_ref, w_ref, b_ref, u_ref, h_ref, z_ref, *, latent_size):
    # ---- fused linear: one MXU matmul for both halves, f32 accumulation ----
    h = jnp.dot(x_ref[...], w_ref[...],
                preferred_element_type=jnp.float32) + b_ref[...]

    mu = h[:, :latent_size]
    loglen = h[:, latent_size:]

    # ---- reparam: z = mu + (2u - 1) * exp(loglen)  (exp runs on the EUP) ----
    u = u_ref[...]
    z = mu + (2.0 * u - 1.0) * jnp.exp(loglen)

    h_ref[...] = h.astype(h_ref.dtype)   # lane-dense [mu | loglen] slab
    z_ref[...] = z.astype(z_ref.dtype)


def prepare_params(w, b, latent_size):
    """One-time glue (call at parameter init, NOT per forward).

    w: (2*latent, inputs_size)  PyTorch nn.Linear weight layout
    b: (2*latent,)              PyTorch nn.Linear bias
    Returns (w_t, b2) with w_t: (inputs_size, 2*latent), b2: (1, 2*latent).
    """
    w_t = jnp.transpose(w)
    b2 = b.reshape(1, 2 * latent_size)
    return w_t, b2


@functools.partial(jax.jit,
                   static_argnames=("latent_size", "block_b", "use_bf16_matmul"))
def uniform_forward(x, w_t, b2, key, *, latent_size, block_b=512,
                    use_bf16_matmul=False):
    """Pallas equivalent of Uniform.forward.

    x   : (B, inputs_size) float32
    w_t : (inputs_size, 2*latent) float32   (from prepare_params)
    b2  : (1, 2*latent) float32             (from prepare_params)
    key : jax PRNG key for the uniform noise (torch.rand_like equivalent)
    Returns (z, (mu, loglen)), each (B, latent_size) float32.
    """
    B, K = x.shape
    L2 = 2 * latent_size

    # Batch tile: big rows amortize the ~0.35us/step grid overhead; respect the
    # (8, 128) rule (second-to-last block dim multiple of 8 or the full dim).
    tb = min(block_b, B)
    if tb != B and tb % 8 != 0:
        tb = max(8, (tb // 8) * 8)
    grid = (pl.cdiv(B, tb),)

    # Uniform [0, 1) noise, one value per (row, latent) — independent across
    # the whole batch regardless of tiling.
    u = jax.random.uniform(key, (B, latent_size), dtype=jnp.float32)

    in_dtype = jnp.bfloat16 if use_bf16_matmul else x.dtype
    x_in = x.astype(in_dtype)
    w_in = w_t.astype(in_dtype)

    kernel = functools.partial(_uniform_kernel, latent_size=latent_size)

    h, z = pl.pallas_call(
        kernel,
        out_shape=(
            jax.ShapeDtypeStruct((B, L2), jnp.float32),           # [mu | loglen]
            jax.ShapeDtypeStruct((B, latent_size), jnp.float32),  # z
        ),
        grid=grid,
        in_specs=[
            pl.BlockSpec((tb, K), lambda i: (i, 0)),               # x tile
            pl.BlockSpec((K, L2), lambda i: (0, 0)),               # W (resident)
            pl.BlockSpec((1, L2), lambda i: (0, 0)),               # b (resident)
            pl.BlockSpec((tb, latent_size), lambda i: (i, 0)),     # u tile
        ],
        out_specs=(
            pl.BlockSpec((tb, L2), lambda i: (i, 0)),
            pl.BlockSpec((tb, latent_size), lambda i: (i, 0)),
        ),
        compiler_params=pltpu.CompilerParams(
            dimension_semantics=("parallel",),
        ),
    )(x_in, w_in, b2, u)

    mu = h[:, :latent_size]
    loglen = h[:, latent_size:]
    return z, (mu, loglen)


if __name__ == "__main__":
    # Small shapes consistent with the module: batch=8, inputs_size=32, latent=32.
    B, INPUTS_SIZE, LATENT = 8, 32, 32

    key = jax.random.PRNGKey(0)
    kx, kw, kb, ku = jax.random.split(key, 4)
    x = jax.random.normal(kx, (B, INPUTS_SIZE), dtype=jnp.float32)
    # Deterministic "nn.Linear(inputs_size, 2*latent)" params (PyTorch layout).
    w = jax.random.normal(kw, (2 * LATENT, INPUTS_SIZE), dtype=jnp.float32) * 0.1
    b = jax.random.normal(kb, (2 * LATENT,), dtype=jnp.float32) * 0.1

    # One-time parameter preparation (hoisted out of the forward hot path).
    w_t, b2 = prepare_params(w, b, LATENT)

    z, (mu, loglen) = uniform_forward(x, w_t, b2, ku, latent_size=LATENT)
    jax.block_until_ready((z, mu, loglen))

    # Sanity: z must lie in [mu - exp(loglen), mu + exp(loglen)];
    # mu/loglen must match the reference x @ W.T + b halves.
    length = jnp.exp(loglen)
    assert bool(jnp.all(z >= mu - length - 1e-5))
    assert bool(jnp.all(z <= mu + length + 1e-5))
    h_ref = x @ w.T + b
    assert bool(jnp.allclose(mu, h_ref[:, :LATENT], atol=1e-4))
    assert bool(jnp.allclose(loglen, h_ref[:, LATENT:], atol=1e-4))

    print("KERNEL_OK")
</pallas_src>

<mosaic_0001>
module attributes {stable_mosaic.version = 11 : i64} {
  func.func @_uniform_kernel(%arg0: i32, %arg1: memref<8x32xf32, #tpu.memory_space<vmem>>, %arg2: memref<32x64xf32, #tpu.memory_space<vmem>>, %arg3: memref<1x64xf32, #tpu.memory_space<vmem>>, %arg4: memref<8x32xf32, #tpu.memory_space<vmem>>, %arg5: memref<8x64xf32, #tpu.memory_space<vmem>>, %arg6: memref<8x32xf32, #tpu.memory_space<vmem>>) attributes {dimension_semantics = [#tpu.dimension_semantics<parallel>], iteration_bounds = array<i64: 1>, scalar_prefetch = 0 : i64, scratch_operands = 0 : i64, tpu.core_type = #tpu.core_type<tc>, window_params = [{transform_indices = @transform_0, window_bounds = array<i64: 8, 32>}, {pipeline_mode = #tpu.pipeline_mode<synchronous>, transform_indices = @transform_1, window_bounds = array<i64: 32, 64>}, {pipeline_mode = #tpu.pipeline_mode<synchronous>, transform_indices = @transform_2, window_bounds = array<i64: 1, 64>}, {transform_indices = @transform_3, window_bounds = array<i64: 8, 32>}, {transform_indices = @transform_4, window_bounds = array<i64: 8, 64>}, {transform_indices = @transform_5, window_bounds = array<i64: 8, 32>}]} {
    %c0 = arith.constant 0 : index
    %c0_0 = arith.constant 0 : index
    %0 = vector.load %arg1[%c0, %c0_0] : memref<8x32xf32, #tpu.memory_space<vmem>>, vector<8x32xf32>
    %c0_1 = arith.constant 0 : index
    %c0_2 = arith.constant 0 : index
    %1 = vector.load %arg2[%c0_1, %c0_2] : memref<32x64xf32, #tpu.memory_space<vmem>>, vector<32x64xf32>
    %cst = arith.constant dense<0.000000e+00> : vector<8x64xf32>
    %2 = tpu.matmul %0, %1, %cst {dimension_numbers = #tpu.dot_dimension_numbers<[1], [0], [0], [1], [0, 0, 1, 1], [], []>} : vector<8x32xf32>, vector<32x64xf32>, vector<8x64xf32> -> vector<8x64xf32>
    %c0_3 = arith.constant 0 : index
    %c0_4 = arith.constant 0 : index
    %3 = vector.load %arg3[%c0_3, %c0_4] : memref<1x64xf32, #tpu.memory_space<vmem>>, vector<1x64xf32>
    %4 = vector.broadcast %3 : vector<1x64xf32> to vector<8x64xf32>
    %5 = arith.addf %2, %4 : vector<8x64xf32>
    %6 = vector.extract_strided_slice %5 {offsets = [0, 0], sizes = [8, 32], strides = [1, 1]} : vector<8x64xf32> to vector<8x32xf32>
    %7 = vector.extract_strided_slice %5 {offsets = [0, 32], sizes = [8, 32], strides = [1, 1]} : vector<8x64xf32> to vector<8x32xf32>
    %c0_5 = arith.constant 0 : index
    %c0_6 = arith.constant 0 : index
    %8 = vector.load %arg4[%c0_5, %c0_6] : memref<8x32xf32, #tpu.memory_space<vmem>>, vector<8x32xf32>
    %cst_7 = arith.constant 2.000000e+00 : f32
    %9 = vector.broadcast %cst_7 : f32 to vector<8x32xf32>
    %10 = arith.mulf %9, %8 : vector<8x32xf32>
    %cst_8 = arith.constant 1.000000e+00 : f32
    %11 = vector.broadcast %cst_8 : f32 to vector<8x32xf32>
    %12 = arith.subf %10, %11 : vector<8x32xf32>
    %13 = math.exp %7 : vector<8x32xf32>
    %14 = arith.mulf %12, %13 : vector<8x32xf32>
    %15 = arith.addf %6, %14 : vector<8x32xf32>
    %c0_9 = arith.constant 0 : index
    %c0_10 = arith.constant 0 : index
    %16 = vector.load %arg5[%c0_9, %c0_10] : memref<8x64xf32, #tpu.memory_space<vmem>>, vector<8x64xf32>
    tpu.vector_store %arg5[%c0_9, %c0_10], %5 {strides = array<i32>} : memref<8x64xf32, #tpu.memory_space<vmem>>, vector<8x64xf32>,
    %c0_11 = arith.constant 0 : index
    %c0_12 = arith.constant 0 : index
    %17 = vector.load %arg6[%c0_11, %c0_12] : memref<8x32xf32, #tpu.memory_space<vmem>>, vector<8x32xf32>
    tpu.vector_store %arg6[%c0_11, %c0_12], %15 {strides = array<i32>} : memref<8x32xf32, #tpu.memory_space<vmem>>, vector<8x32xf32>,
    return
  }
  func.func @transform_0(%arg0: i32) -> (i32, i32) {
    %c0_i32 = arith.constant 0 : i32
    %c0_i32_0 = arith.constant 0 : i32
    return %arg0, %c0_i32 : i32, i32
  }
  func.func @transform_1(%arg0: i32) -> (i32, i32) {
    %c0_i32 = arith.constant 0 : i32
    %c0_i32_0 = arith.constant 0 : i32
    %c0_i32_1 = arith.constant 0 : i32
    return %c0_i32, %c0_i32_0 : i32, i32
  }
  func.func @transform_2(%arg0: i32) -> (i32, i32) {
    %c0_i32 = arith.constant 0 : i32
    %c0_i32_0 = arith.constant 0 : i32
    %c0_i32_1 = arith.constant 0 : i32
    return %c0_i32, %c0_i32_0 : i32, i32
  }
  func.func @transform_3(%arg0: i32) -> (i32, i32) {
    %c0_i32 = arith.constant 0 : i32
    %c0_i32_0 = arith.constant 0 : i32
    return %arg0, %c0_i32 : i32, i32
  }
  func.func @transform_4(%arg0: i32) -> (i32, i32) {
    %c0_i32 = arith.constant 0 : i32
    %c0_i32_0 = arith.constant 0 : i32
    return %arg0, %c0_i32 : i32, i32
  }
  func.func @transform_5(%arg0: i32) -> (i32, i32) {
    %c0_i32 = arith.constant 0 : i32
    %c0_i32_0 = arith.constant 0 : i32
    return %arg0, %c0_i32 : i32, i32
  }
}

</mosaic_0001>

<llo_original>
// kernel: uniform_forward.1
$region0: #{uniform_forward.1}
  #allocation0 [shape = 'u32[]', space=smem, size = 0x4, offset = 0x4, fixed_abs, tag = 'smem constant byte address 0x4 - core index']
  #allocation1 [shape = 'u32[144,128]{1,0:T(1,128)}', space=vmem, size = 0x12000, scoped, tag = 'internal scratch']
  %s0 = inlined_call_operand.vmem [shape: f32[8,32], index: 0, kind: input, shape index: {}]
  %s1 = inlined_call_operand.vmem [shape: f32[32,64], index: 1, kind: input, shape index: {}]
  %s2 = inlined_call_operand.vmem [shape: f32[1,64], index: 2, kind: input, shape index: {}]
  %s3 = inlined_call_operand.vmem [shape: f32[8,32], index: 3, kind: input, shape index: {}]
  %s4 = inlined_call_operand.vmem [shape: f32[8,64], index: 4, kind: output, shape index: {0}]
  %s5 = inlined_call_operand.hbm [shape: f32[8,32], index: 5, kind: output, shape index: {1}]
  %6 = xla_tuple %s4, %s5
  %s7 = sld [smem:[#allocation0]]
  $region34: #{uniform_forward.1} parent=0
    _
  %s9 = ssub.s32 1, %s7
  %s10 = scalar_select 0, %s9, %s7
  $region1: #{uniform_forward.1} parent=0
    #allocation2 [shape = 'u8[4096]{0}', space=vmem, size = 0x1000, scoped, tag = 'output window, operand 1, single buffered']
    #allocation3 [shape = 's32[1]{0}', space=sflag, size = 0x4, scoped, tag = 'scoped memory for uniform_forward.1']
    %11 = vsyncpa [#allocation3], 0
    // Predicated region
    $region2: #{uniform_forward.1} parent=1 // pred_check
      _
    $region3: #{uniform_forward.1} parent=1 // pred_check_branch
      %13 = sbr.rel (0) target = $region5
    $region4: #{uniform_forward.1} parent=1 // pred_region
      _
    $region5: #{uniform_forward.1} parent=1 // pred_fallthru
      _
    // Predicated region
    $region6: #{uniform_forward.1} parent=1 // pred_check
      _
    $region7: #{uniform_forward.1} parent=1 // pred_check_branch
      %15 = sbr.rel (0) target = $region9
    $region8: #{uniform_forward.1} parent=1 // pred_region
      _
    $region9: #{uniform_forward.1} parent=1 // pred_fallthru
      _
    // Predicated region
    $region10: #{uniform_forward.1} parent=1 // pred_check
      _
    $region11: #{uniform_forward.1} parent=1 // pred_check_branch
      %17 = sbr.rel (0) target = $region13
    $region12: #{uniform_forward.1} parent=1 // pred_region
      _
    $region13: #{uniform_forward.1} parent=1 // pred_fallthru
      _
    // Predicated region
    $region14: #{uniform_forward.1} parent=1 // pred_check
      _
    $region15: #{uniform_forward.1} parent=1 // pred_check_branch
      %19 = sbr.rel (0) target = $region17
    $region16: #{uniform_forward.1} parent=1 // pred_region
      _
    $region17: #{uniform_forward.1} parent=1 // pred_fallthru
      _
    %v20 = vld [vmem:[%s0] sm:$0xff]
    %v21 = vld [vmem:[%s1] sm:$0xff]
    %v22 = vld [vmem:[%s1 + $0x8] sm:$0xff]
    %v23 = vld [vmem:[%s1 + $0x10] sm:$0xff]
    %v24 = vld [vmem:[%s1 + $0x18] sm:$0xff]
    %v25 = vld [vmem:[%s2] sm:$0x1]
    %v27 = vlaneseq
    %v28 = vshrl.u32 %v27, 7
    %v29 = vsub.s32 0, %v28
    %v30 = vrot.slane %v25, %v29
    %vm32 = vcmask 261120
    %v34 = vsel %vm32, %v20, 0
    %36 = vmatprep.subr.mxu0 0.0
    %37 = vmatpush1.msra.mxu0 0.0
    %38 = vmatprep.subr.mxu0 0.0
    %39 = vmatpush1.msra.mxu0 0.0
    %40 = vmatprep.subr.mxu0 0.0
    %41 = vmatpush1.msra.mxu0 0.0
    %42 = vmatprep.subr.mxu0 0.0
    %43 = vmatpush1.msra.mxu0 0.0
    %44 = vmatprep.subr.mxu0 0.0
    %45 = vmatpush1.msra.mxu0 0.0
    %46 = vmatprep.subr.mxu0 0.0
    %47 = vmatpush1.msra.mxu0 0.0
    %48 = vmatprep.subr.mxu0 0.0
    %49 = vmatpush1.msra.mxu0 0.0
    %50 = vmatprep.subr.mxu0 0.0
    %51 = vmatpush1.msra.mxu0 0.0
    %52 = vmatprep.subr.mxu0 0.0
    %53 = vmatpush1.msra.mxu0 0.0
    %54 = vmatprep.subr.mxu0 0.0
    %55 = vmatpush1.msra.mxu0 0.0
    %56 = vmatprep.subr.mxu0 0.0
    %57 = vmatpush1.msra.mxu0 0.0
    %58 = vmatprep.subr.mxu0 0.0
    %59 = vmatpush1.msra.mxu0 0.0
    %60 = vmatprep.subr.mxu0 0.0
    %61 = vmatpush1.msra.mxu0 %v24
    %62 = vmatprep.subr.mxu0 0.0
    %63 = vmatpush1.msra.mxu0 %v23
    %64 = vmatprep.subr.mxu0 0.0
    %65 = vmatpush1.msra.mxu0 %v22
    %66 = vmatprep.subr.mxu0 0.0
    %67 = vmatpush1.msra.mxu0 %v21
    %68 = vmatprep.subr.mxu0 0.0
    %69 = vmatpush2.msra.mxu0 0.0
    %70 = vmatprep.subr.mxu0 0.0
    %71 = vmatpush2.msra.mxu0 0.0
    %72 = vmatprep.subr.mxu0 0.0
    %73 = vmatpush2.msra.mxu0 0.0
    %74 = vmatprep.subr.mxu0 0.0
    %75 = vmatpush2.msra.mxu0 0.0
    %76 = vmatprep.subr.mxu0 0.0
    %77 = vmatpush2.msra.mxu0 0.0
    %78 = vmatprep.subr.mxu0 0.0
    %79 = vmatpush2.msra.mxu0 0.0
    %80 = vmatprep.subr.mxu0 0.0
    %81 = vmatpush2.msra.mxu0 0.0
    %82 = vmatprep.subr.mxu0 0.0
    %83 = vmatpush2.msra.mxu0 0.0
    %84 = vmatprep.subr.mxu0 0.0
    %85 = vmatpush2.msra.mxu0 0.0
    %86 = vmatprep.subr.mxu0 0.0
    %87 = vmatpush2.msra.mxu0 0.0
    %88 = vmatprep.subr.mxu0 0.0
    %89 = vmatpush2.msra.mxu0 0.0
    %90 = vmatprep.subr.mxu0 0.0
    %91 = vmatpush2.msra.mxu0 0.0
    %92 = vmatprep.subr.mxu0 0.0
    %93 = vmatpush2.msra.mxu0 0.0
    %94 = vmatprep.subr.mxu0 0.0
    %95 = vmatpush2.msra.mxu0 0.0
    %96 = vmatprep.subr.mxu0 0.0
    %97 = vmatpush2.msra.mxu0 0.0
    %98 = vmatprep.subr.mxu0 0.0
    %99 = vmatpush2.msra.mxu0 0.0
    %100 = vmatprep.mubr.f32.mxu0 0.0
    %101 = vmatmul.mubr.f32.gmra.mxu0 %v34
    %v102 = vpop.f32.mrf.mxu0
    %v103 = vadd.f32 %v30, %v102
    %v104 = vpop.f32.mrf.mxu0
    %105 = vdwg.mxu0
    %v106 = vld [vmem:[%s3] sm:$0xff]
    %v107 = vmul.f32 %v106, 2.0
    %v108 = vsub.f32 %v107, 1.0
    %v109 = vmul.f32 %v103, 1.442695
    %v110 = vpow.pop %v109
    %112 = vrot.lane.b32.xlu0 %v110, 96
    %v113 = vpop.permute.xlu0 %112
    %v115 = vmul.f32 %v108, %v113
    %v116 = vadd.f32 %v103, %v115
    %vm117 = vcmask 523264
    %118 = vst.msk [vmem:[%s4] sm:$0xff] %vm117, %v103
    %119 = vst.msk [vmem:[#allocation2] sm:$0xff] %vm32, %v116
    // Predicated region
    $region18: #{uniform_forward.1} parent=1 // pred_check
      _
    $region19: #{uniform_forward.1} parent=1 // pred_check_branch
      %121 = sbr.rel (0) target = $region21
    $region20: #{uniform_forward.1} parent=1 // pred_region
      _
    $region21: #{uniform_forward.1} parent=1 // pred_fallthru
      _
    // Predicated region
    $region22: #{uniform_forward.1} parent=1 // pred_check
      _
    $region23: #{uniform_forward.1} parent=1 // pred_check_branch
      %123 = sbr.rel (0) target = $region25
    $region24: #{uniform_forward.1} parent=1 // pred_region
      %s125 = ssub.s32 128, 128
      %126 = vsyncadd [#allocation3], %s125
      %s128 = sshll.u32 [#allocation2], 4
      %s129 = int_to_ptr.vmem [resolvable:$true] %s128
      %131 = dma.vmem_to_hbm [thread:$0]  %s129, 128, %s5, [#allocation3]
    $region25: #{uniform_forward.1} parent=1 // pred_fallthru
      _
    // Predicated region
    $region26: #{uniform_forward.1} parent=1 // pred_check
      _
    $region27: #{uniform_forward.1} parent=1 // pred_check_branch
      %133 = sbr.rel (0) target = $region29
    $region28: #{uniform_forward.1} parent=1 // pred_region
      _
    $region29: #{uniform_forward.1} parent=1 // pred_fallthru
      _
    // Predicated region
    $region30: #{uniform_forward.1} parent=1 // pred_check
      _
    $region31: #{uniform_forward.1} parent=1 // pred_check_branch
      %135 = sbr.rel (0) target = $region33
    $region32: #{uniform_forward.1} parent=1 // pred_region
      %136 = dma.done [#allocation3], 128
    $region33: #{uniform_forward.1} parent=1 // pred_fallthru
      _
    %137 = vsyncpa [#allocation3], 1

</llo_original>
